<compile_context>
chip_gen: v7x
topology: tpu7x:2x2x1
jax: 0.10.0
libtpu: 0.0.40
codegen_flags: <defaults>
</compile_context>

<pallas_src>
import math

import jax
import jax.numpy as jnp
from jax.experimental import pallas as pl
from jax.experimental.pallas import tpu as pltpu


_VMEM_LIMIT_BYTES = 48 * 1024 * 1024   # > default scoped limits, < v7x physical (64 MiB)
_TILE_VMEM_BUDGET = 8 * 1024 * 1024    # cap for the per-tile gather working set
_COMBINED_PATH_MAX_PAIRS = 2048        # use flattened score-matrix gather below this


def _round_up(x: int, m: int) -> int:
    return ((x + m - 1) // m) * m


def _choose_tile_e(num_edges: int, requested: int, per_col_bytes: int) -> int:
    """Lane-dense edge tile: multiple of 128, big enough to amortize the ~0.35us
    per-grid-step overhead, capped by the per-tile VMEM working set, and leaving
    >= 2 grid steps when possible so v7x's two TensorCores both get work."""
    e_pad128 = _round_up(max(num_edges, 1), 128)
    t = _round_up(max(requested, 128), 128)
    by_vmem = max(128, (_TILE_VMEM_BUDGET // max(per_col_bytes, 1)) // 128 * 128)
    t = min(t, by_vmem, e_pad128)
    if e_pad128 >= 256:
        t = min(t, max(128, (e_pad128 // 2) // 128 * 128))
    return t


def _compiler_params():
    return pltpu.CompilerParams(
        dimension_semantics=("parallel",),
        vmem_limit_bytes=_VMEM_LIMIT_BYTES,
    )


def _table_spec(block_shape, single_buffer: bool):
    """BlockSpec for a VMEM-resident (constant index_map) table.  Single buffering
    halves its VMEM footprint; the block never changes so nothing is re-fetched."""
    if single_buffer:
        return pl.BlockSpec(block_shape, lambda i: (0, 0),
                            pipeline_mode=pl.Buffered(1))
    return pl.BlockSpec(block_shape, lambda i: (0, 0))


def _call_with_single_buffer_fallback(call):
    try:
        return call(True)
    except Exception:  # older JAX without single-buffer pipeline mode
        return call(False)


# ----------------------------------------------------------------------------- kernels


def _combined_gather_kernel(cidx_ref, s_ref, out_ref):
    # cidx_ref: (1, TILE_E) int32 combined edge indices (src * N_dis + dst).
    # s_ref:    (8, NP)     f32; row 0 holds the flattened (scaled) score matrix,
    #                       rows 1..7 are zero sublane padding for a clean MXU shape.
    # out_ref:  (1, TILE_E) per-edge scores (lane-dense store).
    np_total = s_ref.shape[1]
    tile_e = out_ref.shape[1]

    iota = jax.lax.broadcasted_iota(jnp.int32, (np_total, tile_e), 0)
    onehot = (iota == cidx_ref[...]).astype(s_ref.dtype)                 # (NP, TILE_E)

    # Gather on the MXU: (8, NP) @ (NP, TILE_E) -> (8, TILE_E); only row 0 is data.
    h = jnp.dot(s_ref[...], onehot,
                preferred_element_type=jnp.float32)[0:1, :]              # (1, TILE_E)

    out_ref[...] = pl.reciprocal(1.0 + jnp.exp(-h),
                                 approx=False).astype(out_ref.dtype)


def _dual_gather_kernel(idx_ref, hT_ref, dT_ref, out_ref):
    # idx_ref: (2, TILE_E) int32; row 0 = drug (src) index, row 1 = disease (dst).
    # hT_ref : (D, N_drug_p) drug features, feature-major, VMEM-resident.
    # dT_ref : (D, N_dis_p)  disease features, feature-major, VMEM-resident.
    # out_ref: (1, TILE_E)   per-edge scores.
    d = hT_ref.shape[0]
    n_drug = hT_ref.shape[1]
    n_dis = dT_ref.shape[1]
    tile_e = out_ref.shape[1]
    tdtype = hT_ref.dtype

    idx = idx_ref[...]
    src = idx[0:1, :]
    dst = idx[1:2, :]

    onehot_src = (jax.lax.broadcasted_iota(jnp.int32, (n_drug, tile_e), 0)
                  == src).astype(tdtype)
    onehot_dst = (jax.lax.broadcasted_iota(jnp.int32, (n_dis, tile_e), 0)
                  == dst).astype(tdtype)

    # Row gather on the MXU, feature-major: (D, N) @ (N, TILE_E) -> (D, TILE_E).
    src_h = jnp.dot(hT_ref[...], onehot_src, preferred_element_type=jnp.float32)
    dst_h = jnp.dot(dT_ref[...], onehot_dst, preferred_element_type=jnp.float32)

    # Elementwise product (all 128 lanes active), mean over features (sublane reduce).
    h = jnp.sum(src_h * dst_h, axis=0, keepdims=True) * (1.0 / d)        # (1, TILE_E)

    out_ref[...] = pl.reciprocal(1.0 + jnp.exp(-h),
                                 approx=False).astype(out_ref.dtype)


# ----------------------------------------------------------------------------- wrappers


def _forward_combined(h_drug, d_disease, src_idx, dst_idx, tile_e):
    n_drug, D = h_drug.shape
    n_dis, _ = d_disease.shape
    E = int(src_idx.shape[0])
    n_pairs = n_drug * n_dis

    # One well-shaped K=D matmul in the wrapper: S[i, j] = mean_d(h_drug[i]*d_dis[j]).
    s = jnp.dot(h_drug, d_disease.T,
                preferred_element_type=jnp.float32) * (1.0 / D)          # (N_drug, N_dis)
    np_total = _round_up(n_pairs, 128)
    s_tab = jnp.zeros((8, np_total), jnp.float32).at[0, :n_pairs].set(
        s.astype(jnp.float32).reshape(-1))

    per_col_bytes = np_total * 4 + 16      # one-hot column + idx + out
    tile = _choose_tile_e(E, tile_e, per_col_bytes)
    e_pad = _round_up(E, tile)

    # Combined (already packed) edge index; index 0 pads (sliced off afterwards).
    cidx = src_idx.astype(jnp.int32) * n_dis + dst_idx.astype(jnp.int32)
    cidx = jnp.pad(cidx, (0, e_pad - E)).reshape(1, e_pad)

    def call(single_buffer_tables):
        out = pl.pallas_call(
            _combined_gather_kernel,
            out_shape=jax.ShapeDtypeStruct((1, e_pad), jnp.float32),
            grid_spec=pl.GridSpec(
                grid=(e_pad // tile,),
                in_specs=[
                    pl.BlockSpec((1, tile), lambda i: (0, i)),           # combined idx
                    _table_spec((8, np_total), single_buffer_tables),    # score table
                ],
                out_specs=pl.BlockSpec((1, tile), lambda i: (0, i)),
            ),
            compiler_params=_compiler_params(),
        )(cidx, s_tab)
        return jax.block_until_ready(out)

    out = _call_with_single_buffer_fallback(call)
    return out.reshape(e_pad)[:E]


def _forward_gather(h_drug, d_disease, src_idx, dst_idx, tile_e):
    n_drug, D = h_drug.shape
    n_dis, _ = d_disease.shape
    E = int(src_idx.shape[0])

    # Feature-major resident tables; node (lane) dim padded to 128 (free: lanes are
    # physically 128-padded anyway).  Padded columns are never selected.  The caller
    # dtype is preserved so the kernel never casts per grid step.
    n_drug_p = _round_up(n_drug, 128)
    n_dis_p = _round_up(n_dis, 128)
    hT = jnp.zeros((D, n_drug_p), h_drug.dtype).at[:, :n_drug].set(h_drug.T)
    dT = jnp.zeros((D, n_dis_p), d_disease.dtype).at[:, :n_dis].set(d_disease.T)

    per_col_bytes = ((n_drug_p + n_dis_p) * jnp.dtype(hT.dtype).itemsize  # one-hots
                     + 2 * D * 4                                          # gathered f32
                     + 12)                                                # idx + out
    tile = _choose_tile_e(E, tile_e, per_col_bytes)
    e_pad = _round_up(E, tile)

    # Both endpoint index vectors packed into one array -> one small DMA per step.
    idx = jnp.stack([
        jnp.pad(src_idx.astype(jnp.int32), (0, e_pad - E)),
        jnp.pad(dst_idx.astype(jnp.int32), (0, e_pad - E)),
    ])                                                                    # (2, E_pad)

    def call(single_buffer_tables):
        out = pl.pallas_call(
            _dual_gather_kernel,
            out_shape=jax.ShapeDtypeStruct((1, e_pad), jnp.float32),
            grid_spec=pl.GridSpec(
                grid=(e_pad // tile,),
                in_specs=[
                    pl.BlockSpec((2, tile), lambda i: (0, i)),            # packed idx
                    _table_spec((D, n_drug_p), single_buffer_tables),     # drug table
                    _table_spec((D, n_dis_p), single_buffer_tables),      # disease table
                ],
                out_specs=pl.BlockSpec((1, tile), lambda i: (0, i)),
            ),
            compiler_params=_compiler_params(),
        )(idx, hT, dT)
        return jax.block_until_ready(out)

    out = _call_with_single_buffer_fallback(call)
    return out.reshape(e_pad)[:E]


def score_predictor_forward(h_drug, d_disease, src_idx, dst_idx, *,
                            tile_e=4096, path=None):
    """Edge scores: sigmoid(mean(h_drug[src] * d_disease[dst], axis=1)).

    h_drug:    [N_drug, D]       d_disease: [N_disease, D]
    src_idx:   [E] int indices into h_drug (must be < N_drug; not validated)
    dst_idx:   [E] int indices into d_disease
    returns:   [E] float32 scores
    """
    n_drug, D = h_drug.shape
    n_dis, D2 = d_disease.shape
    assert D == D2, "drug / disease feature dims must match"

    if path is None:
        path = "combined" if n_drug * n_dis <= _COMBINED_PATH_MAX_PAIRS else "gather"
    if path == "combined":
        return _forward_combined(h_drug, d_disease, src_idx, dst_idx, tile_e)
    return _forward_gather(h_drug, d_disease, src_idx, dst_idx, tile_e)


def xavier_uniform(key, shape, dtype=jnp.float32):
    # Matches torch.nn.init.xavier_uniform_ for a 2D weight.
    fan_in, fan_out = shape[1], shape[0]
    a = math.sqrt(6.0 / (fan_in + fan_out))
    return jax.random.uniform(key, shape, dtype=dtype, minval=-a, maxval=a)


if __name__ == "__main__":
    key = jax.random.PRNGKey(0)
    k_w, k_drug, k_dis, k_src, k_dst = jax.random.split(key, 5)

    dim = 32
    n_drug = 8
    n_disease = 8
    n_edges = 16

    # Module parameter (unused by forward(), kept for parity with __init__).
    w = xavier_uniform(k_w, (dim, dim))  # noqa: F841

    h_drug = jax.random.normal(k_drug, (n_drug, dim), dtype=jnp.float32)
    d_disease = jax.random.normal(k_dis, (n_disease, dim), dtype=jnp.float32)

    # Deterministic synthetic 'treath' edges between Drug and Disease nodes.
    src_idx = jax.random.randint(k_src, (n_edges,), 0, n_drug, dtype=jnp.int32)
    dst_idx = jax.random.randint(k_dst, (n_edges,), 0, n_disease, dtype=jnp.int32)

    # Pure-JAX reference.
    ref = jax.nn.sigmoid(
        jnp.mean(jnp.take(h_drug, src_idx, 0) * jnp.take(d_disease, dst_idx, 0),
                 axis=1))

    # Default path (combined score-matrix gather for these small node tables).
    scores = jax.block_until_ready(
        score_predictor_forward(h_drug, d_disease, src_idx, dst_idx))
    assert scores.shape == (n_edges,)
    assert jnp.allclose(scores, ref, atol=1e-4, rtol=1e-4), float(
        jnp.max(jnp.abs(scores - ref)))

    # Also exercise the dual one-hot gather path (used for larger node tables).
    scores_g = jax.block_until_ready(
        score_predictor_forward(h_drug, d_disease, src_idx, dst_idx, path="gather"))
    assert jnp.allclose(scores_g, ref, atol=1e-4, rtol=1e-4), float(
        jnp.max(jnp.abs(scores_g - ref)))

    print("KERNEL_OK")
</pallas_src>

<mosaic_0001>
module attributes {stable_mosaic.version = 11 : i64} {
  func.func @_combined_gather_kernel(%arg0: i32, %arg1: memref<1x128xi32, #tpu.memory_space<vmem>>, %arg2: memref<8x128xf32, #tpu.memory_space<vmem>>, %arg3: memref<1x128xf32, #tpu.memory_space<vmem>>) attributes {dimension_semantics = [#tpu.dimension_semantics<parallel>], iteration_bounds = array<i64: 1>, scalar_prefetch = 0 : i64, scratch_operands = 0 : i64, tpu.core_type = #tpu.core_type<tc>, window_params = [{transform_indices = @transform_0, window_bounds = array<i64: 1, 128>}, {pipeline_mode = #tpu.pipeline_mode<synchronous>, transform_indices = @transform_1, window_bounds = array<i64: 8, 128>}, {transform_indices = @transform_2, window_bounds = array<i64: 1, 128>}]} {
    %0 = tpu.iota {dimensions = array<i32: 0>} : vector<128x128xi32>
    %c0 = arith.constant 0 : index
    %c0_0 = arith.constant 0 : index
    %1 = vector.load %arg1[%c0, %c0_0] : memref<1x128xi32, #tpu.memory_space<vmem>>, vector<1x128xi32>
    %2 = vector.broadcast %1 : vector<1x128xi32> to vector<128x128xi32>
    %3 = arith.cmpi eq, %0, %2 : vector<128x128xi32>
    %4 = arith.extui %3 : vector<128x128xi1> to vector<128x128xi32>
    %5 = arith.sitofp %4 : vector<128x128xi32> to vector<128x128xf32>
    %c0_1 = arith.constant 0 : index
    %c0_2 = arith.constant 0 : index
    %6 = vector.load %arg2[%c0_1, %c0_2] : memref<8x128xf32, #tpu.memory_space<vmem>>, vector<8x128xf32>
    %cst = arith.constant dense<0.000000e+00> : vector<8x128xf32>
    %7 = tpu.matmul %6, %5, %cst {dimension_numbers = #tpu.dot_dimension_numbers<[1], [0], [0], [1], [0, 0, 1, 1], [], []>} : vector<8x128xf32>, vector<128x128xf32>, vector<8x128xf32> -> vector<8x128xf32>
    %8 = vector.extract_strided_slice %7 {offsets = [0, 0], sizes = [1, 128], strides = [1, 1]} : vector<8x128xf32> to vector<1x128xf32>
    %cst_3 = arith.constant 0.000000e+00 : f32
    %9 = vector.broadcast %cst_3 : f32 to vector<1x128xf32>
    %10 = arith.subf %9, %8 : vector<1x128xf32>
    %11 = math.exp %10 : vector<1x128xf32>
    %cst_4 = arith.constant 1.000000e+00 : f32
    %12 = vector.broadcast %cst_4 : f32 to vector<1x128xf32>
    %13 = arith.addf %12, %11 : vector<1x128xf32>
    %14 = tpu.reciprocal %13 : vector<1x128xf32> -> vector<1x128xf32>
    %c0_5 = arith.constant 0 : index
    %c0_6 = arith.constant 0 : index
    %15 = vector.load %arg3[%c0_5, %c0_6] : memref<1x128xf32, #tpu.memory_space<vmem>>, vector<1x128xf32>
    tpu.vector_store %arg3[%c0_5, %c0_6], %14 {strides = array<i32>} : memref<1x128xf32, #tpu.memory_space<vmem>>, vector<1x128xf32>,
    return
  }
  func.func @transform_0(%arg0: i32) -> (i32, i32) {
    %c0_i32 = arith.constant 0 : i32
    %c0_i32_0 = arith.constant 0 : i32
    return %c0_i32, %arg0 : i32, i32
  }
  func.func @transform_1(%arg0: i32) -> (i32, i32) {
    %c0_i32 = arith.constant 0 : i32
    %c0_i32_0 = arith.constant 0 : i32
    %c0_i32_1 = arith.constant 0 : i32
    return %c0_i32, %c0_i32_0 : i32, i32
  }
  func.func @transform_2(%arg0: i32) -> (i32, i32) {
    %c0_i32 = arith.constant 0 : i32
    %c0_i32_0 = arith.constant 0 : i32
    return %c0_i32, %arg0 : i32, i32
  }
}

module attributes {stable_mosaic.version = 11 : i64} {
  func.func @_combined_gather_kernel(%arg0: i32, %arg1: memref<1x128xi32, #tpu.memory_space<vmem>>, %arg2: memref<8x128xf32, #tpu.memory_space<vmem>>, %arg3: memref<1x128xf32, #tpu.memory_space<vmem>>) attributes {dimension_semantics = [#tpu.dimension_semantics<parallel>], iteration_bounds = array<i64: 1>, scalar_prefetch = 0 : i64, scratch_operands = 0 : i64, tpu.core_type = #tpu.core_type<tc>, window_params = [{transform_indices = @transform_0, window_bounds = array<i64: 1, 128>}, {pipeline_mode = #tpu.pipeline_mode<synchronous>, transform_indices = @transform_1, window_bounds = array<i64: 8, 128>}, {transform_indices = @transform_2, window_bounds = array<i64: 1, 128>}]} {
    %0 = tpu.iota {dimensions = array<i32: 0>} : vector<128x128xi32>
    %c0 = arith.constant 0 : index
    %c0_0 = arith.constant 0 : index
    %1 = vector.load %arg1[%c0, %c0_0] : memref<1x128xi32, #tpu.memory_space<vmem>>, vector<1x128xi32>
    %2 = vector.broadcast %1 : vector<1x128xi32> to vector<128x128xi32>
    %3 = arith.cmpi eq, %0, %2 : vector<128x128xi32>
    %4 = arith.extui %3 : vector<128x128xi1> to vector<128x128xi32>
    %5 = arith.sitofp %4 : vector<128x128xi32> to vector<128x128xf32>
    %c0_1 = arith.constant 0 : index
    %c0_2 = arith.constant 0 : index
    %6 = vector.load %arg2[%c0_1, %c0_2] : memref<8x128xf32, #tpu.memory_space<vmem>>, vector<8x128xf32>
    %cst = arith.constant dense<0.000000e+00> : vector<8x128xf32>
    %7 = tpu.matmul %6, %5, %cst {dimension_numbers = #tpu.dot_dimension_numbers<[1], [0], [0], [1], [0, 0, 1, 1], [], []>} : vector<8x128xf32>, vector<128x128xf32>, vector<8x128xf32> -> vector<8x128xf32>
    %8 = vector.extract_strided_slice %7 {offsets = [0, 0], sizes = [1, 128], strides = [1, 1]} : vector<8x128xf32> to vector<1x128xf32>
    %cst_3 = arith.constant 0.000000e+00 : f32
    %9 = vector.broadcast %cst_3 : f32 to vector<1x128xf32>
    %10 = arith.subf %9, %8 : vector<1x128xf32>
    %11 = math.exp %10 : vector<1x128xf32>
    %cst_4 = arith.constant 1.000000e+00 : f32
    %12 = vector.broadcast %cst_4 : f32 to vector<1x128xf32>
    %13 = arith.addf %12, %11 : vector<1x128xf32>
    %14 = tpu.reciprocal %13 : vector<1x128xf32> -> vector<1x128xf32>
    %c0_5 = arith.constant 0 : index
    %c0_6 = arith.constant 0 : index
    %15 = vector.load %arg3[%c0_5, %c0_6] : memref<1x128xf32, #tpu.memory_space<vmem>>, vector<1x128xf32>
    tpu.vector_store %arg3[%c0_5, %c0_6], %14 {strides = array<i32>} : memref<1x128xf32, #tpu.memory_space<vmem>>, vector<1x128xf32>,
    return
  }
  func.func @transform_0(%arg0: i32) -> (i32, i32) {
    %c0_i32 = arith.constant 0 : i32
    %c0_i32_0 = arith.constant 0 : i32
    return %c0_i32, %arg0 : i32, i32
  }
  func.func @transform_1(%arg0: i32) -> (i32, i32) {
    %c0_i32 = arith.constant 0 : i32
    %c0_i32_0 = arith.constant 0 : i32
    %c0_i32_1 = arith.constant 0 : i32
    return %c0_i32, %c0_i32_0 : i32, i32
  }
  func.func @transform_2(%arg0: i32) -> (i32, i32) {
    %c0_i32 = arith.constant 0 : i32
    %c0_i32_0 = arith.constant 0 : i32
    return %c0_i32, %arg0 : i32, i32
  }
}

</mosaic_0001>

<llo_original>
// kernel: tpu_custom_call.1
$region0: #{tpu_custom_call.1}
  #allocation0 [shape = 'u32[]', space=smem, size = 0x4, offset = 0x4, fixed_abs, tag = 'smem constant byte address 0x4 - core index']
  #allocation1 [shape = 'u32[144,128]{1,0:T(1,128)}', space=vmem, size = 0x12000, scoped, tag = 'internal scratch']
  %s0 = inlined_call_operand.hbm [shape: s32[1,128], index: 0, kind: input, shape index: {}]
  %s1 = inlined_call_operand.hbm [shape: f32[8,128], index: 1, kind: input, shape index: {}]
  %s2 = inlined_call_operand.hbm [shape: f32[1,128], index: 2, kind: output, shape index: {}]
  %s3 = sld [smem:[#allocation0]]
  $region26: #{tpu_custom_call.1} parent=0
    _
  %s5 = ssub.s32 1, %s3
  %s6 = scalar_select 0, %s5, %s3
  $region1: #{tpu_custom_call.1} parent=0
    #allocation2 [shape = 'u8[512]{0}', space=vmem, size = 0x400, scoped, tag = 'input window, operand 0, single buffered']
    #allocation3 [shape = 's32[1]{0}', space=sflag, size = 0x4, scoped, tag = 'scoped memory for tpu_custom_call.1']
    #allocation4 [shape = 's32[1]{0}', space=sflag, size = 0x4, scoped, tag = 'scoped memory for tpu_custom_call.1']
    #allocation5 [shape = 'u8[4096]{0}', space=vmem, size = 0x1000, scoped, tag = 'input window, operand 1, single buffered']
    #allocation6 [shape = 's32[1]{0}', space=sflag, size = 0x4, scoped, tag = 'scoped memory for tpu_custom_call.1']
    #allocation7 [shape = 'u8[512]{0}', space=vmem, size = 0x400, scoped, tag = 'output window, operand 0, single buffered']
    %7 = vsyncpa [#allocation3], 0
    %8 = vsyncpa [#allocation6], 0
    %9 = vsyncpa [#allocation4], 0
    // Predicated region
    $region2: #{tpu_custom_call.1} parent=1 // pred_check
      _
    $region3: #{tpu_custom_call.1} parent=1 // pred_check_branch
      %11 = sbr.rel (0) target = $region5
    $region4: #{tpu_custom_call.1} parent=1 // pred_region
      %s13 = ssub.s32 16, 16
      %14 = vsyncadd [#allocation3], %s13
      %s16 = sshll.u32 [#allocation2], 4
      %s17 = int_to_ptr.vmem [resolvable:$true] %s16
      %19 = dma.hbm_to_vmem [thread:$0]  %s0, 16, %s17, [#allocation3]
    $region5: #{tpu_custom_call.1} parent=1 // pred_fallthru
      _
    // Predicated region
    $region6: #{tpu_custom_call.1} parent=1 // pred_check
      _
    $region7: #{tpu_custom_call.1} parent=1 // pred_check_branch
      %21 = sbr.rel (0) target = $region9
    $region8: #{tpu_custom_call.1} parent=1 // pred_region
      %s23 = ssub.s32 128, 128
      %24 = vsyncadd [#allocation6], %s23
      %s26 = sshll.u32 [#allocation5], 4
      %s27 = int_to_ptr.vmem [resolvable:$true] %s26
      %29 = dma.hbm_to_vmem [thread:$0]  %s1, 128, %s27, [#allocation6]
    $region9: #{tpu_custom_call.1} parent=1 // pred_fallthru
      _
    // Predicated region
    $region10: #{tpu_custom_call.1} parent=1 // pred_check
      _
    $region11: #{tpu_custom_call.1} parent=1 // pred_check_branch
      %31 = sbr.rel (0) target = $region13
    $region12: #{tpu_custom_call.1} parent=1 // pred_region
      %32 = dma.done [#allocation3], 16
    $region13: #{tpu_custom_call.1} parent=1 // pred_fallthru
      _
    // Predicated region
    $region14: #{tpu_custom_call.1} parent=1 // pred_check
      _
    $region15: #{tpu_custom_call.1} parent=1 // pred_check_branch
      %34 = sbr.rel (0) target = $region17
    $region16: #{tpu_custom_call.1} parent=1 // pred_region
      %35 = dma.done [#allocation6], 128
    $region17: #{tpu_custom_call.1} parent=1 // pred_fallthru
      _
    %v36 = vlaneseq
    %v37 = vshrl.u32 %v36, 7
    %v38 = vadd.s32 %v37, 8
    %v39 = vadd.s32 %v37, 16
    %v40 = vadd.s32 %v37, 24
    %v41 = vadd.s32 %v37, 32
    %v42 = vadd.s32 %v37, 40
    %v43 = vadd.s32 %v37, 48
    %v44 = vadd.s32 %v37, 56
    %v45 = vadd.s32 %v37, 64
    %v46 = vadd.s32 %v37, 72
    %v47 = vadd.s32 %v37, 80
    %v48 = vadd.s32 %v37, 88
    %v49 = vadd.s32 %v37, 96
    %v50 = vadd.s32 %v37, 104
    %v51 = vadd.s32 %v37, 112
    %v52 = vadd.s32 %v37, 120
    %v53 = vld [vmem:[#allocation2] sm:$0x1]
    %v54 = vlaneseq
    %v55 = vshrl.u32 %v54, 7
    %v56 = vsub.s32 0, %v55
    %v57 = vrot.slane %v53, %v56
    %vm58 = vcmp.eq.s32.totalorder %v37, %v57
    %vm59 = vcmp.eq.s32.totalorder %v38, %v57
    %vm60 = vcmp.eq.s32.totalorder %v39, %v57
    %vm61 = vcmp.eq.s32.totalorder %v40, %v57
    %vm62 = vcmp.eq.s32.totalorder %v41, %v57
    %vm63 = vcmp.eq.s32.totalorder %v42, %v57
    %vm64 = vcmp.eq.s32.totalorder %v43, %v57
    %vm65 = vcmp.eq.s32.totalorder %v44, %v57
    %vm66 = vcmp.eq.s32.totalorder %v45, %v57
    %vm67 = vcmp.eq.s32.totalorder %v46, %v57
    %vm68 = vcmp.eq.s32.totalorder %v47, %v57
    %vm69 = vcmp.eq.s32.totalorder %v48, %v57
    %vm70 = vcmp.eq.s32.totalorder %v49, %v57
    %vm71 = vcmp.eq.s32.totalorder %v50, %v57
    %vm72 = vcmp.eq.s32.totalorder %v51, %v57
    %vm73 = vcmp.eq.s32.totalorder %v52, %v57
    %v74 = vsel %vm58, 1, 0
    %v75 = vsel %vm59, 1, 0
    %v76 = vsel %vm60, 1, 0
    %v77 = vsel %vm61, 1, 0
    %v78 = vsel %vm62, 1, 0
    %v79 = vsel %vm63, 1, 0
    %v80 = vsel %vm64, 1, 0
    %v81 = vsel %vm65, 1, 0
    %v82 = vsel %vm66, 1, 0
    %v83 = vsel %vm67, 1, 0
    %v84 = vsel %vm68, 1, 0
    %v85 = vsel %vm69, 1, 0
    %v86 = vsel %vm70, 1, 0
    %v87 = vsel %vm71, 1, 0
    %v88 = vsel %vm72, 1, 0
    %v89 = vsel %vm73, 1, 0
    %v90 = vcvt.s32.f32 %v74
    %v91 = vcvt.s32.f32 %v75
    %v92 = vcvt.s32.f32 %v76
    %v93 = vcvt.s32.f32 %v77
    %v94 = vcvt.s32.f32 %v78
    %v95 = vcvt.s32.f32 %v79
    %v96 = vcvt.s32.f32 %v80
    %v97 = vcvt.s32.f32 %v81
    %v98 = vcvt.s32.f32 %v82
    %v99 = vcvt.s32.f32 %v83
    %v100 = vcvt.s32.f32 %v84
    %v101 = vcvt.s32.f32 %v85
    %v102 = vcvt.s32.f32 %v86
    %v103 = vcvt.s32.f32 %v87
    %v104 = vcvt.s32.f32 %v88
    %v105 = vcvt.s32.f32 %v89
    %v106 = vld [vmem:[#allocation5] sm:$0xff]
    %107 = vmatprep.subr.mxu0 0.0
    %108 = vmatpush1.msra.mxu0 %v90
    %109 = vmatprep.subr.mxu0 0.0
    %110 = vmatpush1.msra.mxu0 %v91
    %111 = vmatprep.subr.mxu0 0.0
    %112 = vmatpush1.msra.mxu0 %v92
    %113 = vmatprep.subr.mxu0 0.0
    %114 = vmatpush1.msra.mxu0 %v93
    %115 = vmatprep.subr.mxu0 0.0
    %116 = vmatpush1.msra.mxu0 %v94
    %117 = vmatprep.subr.mxu0 0.0
    %118 = vmatpush1.msra.mxu0 %v95
    %119 = vmatprep.subr.mxu0 0.0
    %120 = vmatpush1.msra.mxu0 %v96
    %121 = vmatprep.subr.mxu0 0.0
    %122 = vmatpush1.msra.mxu0 %v97
    %123 = vmatprep.subr.mxu0 0.0
    %124 = vmatpush1.msra.mxu0 %v98
    %125 = vmatprep.subr.mxu0 0.0
    %126 = vmatpush1.msra.mxu0 %v99
    %127 = vmatprep.subr.mxu0 0.0
    %128 = vmatpush1.msra.mxu0 %v100
    %129 = vmatprep.subr.mxu0 0.0
    %130 = vmatpush1.msra.mxu0 %v101
    %131 = vmatprep.subr.mxu0 0.0
    %132 = vmatpush1.msra.mxu0 %v102
    %133 = vmatprep.subr.mxu0 0.0
    %134 = vmatpush1.msra.mxu0 %v103
    %135 = vmatprep.subr.mxu0 0.0
    %136 = vmatpush1.msra.mxu0 %v104
    %137 = vmatprep.subr.mxu0 0.0
    %138 = vmatpush1.msra.mxu0 %v105
    %139 = vmatprep.subr.mxu0 0.0
    %140 = vmatpush1.msra.mxu0 0.0
    %141 = vmatprep.subr.mxu0 0.0
    %142 = vmatpush1.msra.mxu0 0.0
    %143 = vmatprep.subr.mxu0 0.0
    %144 = vmatpush1.msra.mxu0 0.0
    %145 = vmatprep.subr.mxu0 0.0
    %146 = vmatpush1.msra.mxu0 0.0
    %147 = vmatprep.subr.mxu0 0.0
    %148 = vmatpush1.msra.mxu0 0.0
    %149 = vmatprep.subr.mxu0 0.0
    %150 = vmatpush1.msra.mxu0 0.0
    %151 = vmatprep.subr.mxu0 0.0
    %152 = vmatpush1.msra.mxu0 0.0
    %153 = vmatprep.subr.mxu0 0.0
    %154 = vmatpush1.msra.mxu0 0.0
    %155 = vmatprep.subr.mxu0 0.0
    %156 = vmatpush1.msra.mxu0 0.0
    %157 = vmatprep.subr.mxu0 0.0
    %158 = vmatpush1.msra.mxu0 0.0
    %159 = vmatprep.subr.mxu0 0.0
    %160 = vmatpush1.msra.mxu0 0.0
    %161 = vmatprep.subr.mxu0 0.0
    %162 = vmatpush1.msra.mxu0 0.0
    %163 = vmatprep.subr.mxu0 0.0
    %164 = vmatpush1.msra.mxu0 0.0
    %165 = vmatprep.subr.mxu0 0.0
    %166 = vmatpush1.msra.mxu0 0.0
    %167 = vmatprep.subr.mxu0 0.0
    %168 = vmatpush1.msra.mxu0 0.0
    %169 = vmatprep.subr.mxu0 0.0
    %170 = vmatpush1.msra.mxu0 0.0
    %171 = vmatprep.mubr.f32.mxu0 0.0
    %172 = vmatmul.mubr.f32.gmra.mrb[0].mxu0 %v106
    %v173 = vpop.f32.mrb[0].mxu0
    %v174 = vadd.f32 0.0, %v173
    %v175 = vpop.f32.mrb[0].mxu0
    %176 = vdwg.mxu0
    %v177 = vsub.f32 0.0, %v174
    %v178 = vmul.f32 %v177, 1.442695
    %v179 = vpow.pop %v178
    %v180 = vadd.f32 %v179, 1.0
    %v181 = vrcp.pop %v180
    %182 = vst [vmem:[#allocation7] sm:$0x1] %v181
    // Predicated region
    $region18: #{tpu_custom_call.1} parent=1 // pred_check
      _
    $region19: #{tpu_custom_call.1} parent=1 // pred_check_branch
      %184 = sbr.rel (0) target = $region21
    $region20: #{tpu_custom_call.1} parent=1 // pred_region
      %s186 = ssub.s32 16, 16
      %187 = vsyncadd [#allocation4], %s186
      %s189 = sshll.u32 [#allocation7], 4
      %s190 = int_to_ptr.vmem [resolvable:$true] %s189
      %192 = dma.vmem_to_hbm [thread:$0]  %s190, 16, %s2, [#allocation4]
    $region21: #{tpu_custom_call.1} parent=1 // pred_fallthru
      _
    // Predicated region
    $region22: #{tpu_custom_call.1} parent=1 // pred_check
      _
    $region23: #{tpu_custom_call.1} parent=1 // pred_check_branch
      %194 = sbr.rel (0) target = $region25
    $region24: #{tpu_custom_call.1} parent=1 // pred_region
      %195 = dma.done [#allocation4], 16
    $region25: #{tpu_custom_call.1} parent=1 // pred_fallthru
      _
    %196 = vsyncpa [#allocation3], 1
    %197 = vsyncpa [#allocation6], 1
    %198 = vsyncpa [#allocation4], 1

// kernel: tpu_custom_call.1
$region0: #{tpu_custom_call.1}
  #allocation0 [shape = 'u32[]', space=smem, size = 0x4, offset = 0x4, fixed_abs, tag = 'smem constant byte address 0x4 - core index']
  #allocation1 [shape = 'u32[144,128]{1,0:T(1,128)}', space=vmem, size = 0x12000, scoped, tag = 'internal scratch']
  %s0 = inlined_call_operand.hbm [shape: s32[1,128], index: 0, kind: input, shape index: {}]
  %s1 = inlined_call_operand.hbm [shape: f32[8,128], index: 1, kind: input, shape index: {}]
  %s2 = inlined_call_operand.hbm [shape: f32[1,128], index: 2, kind: output, shape index: {}]
  %s3 = sld [smem:[#allocation0]]
  $region26: #{tpu_custom_call.1} parent=0
    _
  %s5 = ssub.s32 1, %s3
  %s6 = scalar_select 0, %s5, %s3
  $region1: #{tpu_custom_call.1} parent=0
    #allocation2 [shape = 'u8[512]{0}', space=vmem, size = 0x400, scoped, tag = 'input window, operand 0, single buffered']
    #allocation3 [shape = 's32[1]{0}', space=sflag, size = 0x4, scoped, tag = 'scoped memory for tpu_custom_call.1']
    #allocation4 [shape = 's32[1]{0}', space=sflag, size = 0x4, scoped, tag = 'scoped memory for tpu_custom_call.1']
    #allocation5 [shape = 'u8[4096]{0}', space=vmem, size = 0x1000, scoped, tag = 'input window, operand 1, single buffered']
    #allocation6 [shape = 's32[1]{0}', space=sflag, size = 0x4, scoped, tag = 'scoped memory for tpu_custom_call.1']
    #allocation7 [shape = 'u8[512]{0}', space=vmem, size = 0x400, scoped, tag = 'output window, operand 0, single buffered']
    %7 = vsyncpa [#allocation3], 0
    %8 = vsyncpa [#allocation6], 0
    %9 = vsyncpa [#allocation4], 0
    // Predicated region
    $region2: #{tpu_custom_call.1} parent=1 // pred_check
      _
    $region3: #{tpu_custom_call.1} parent=1 // pred_check_branch
      %11 = sbr.rel (0) target = $region5
    $region4: #{tpu_custom_call.1} parent=1 // pred_region
      %s13 = ssub.s32 16, 16
      %14 = vsyncadd [#allocation3], %s13
      %s16 = sshll.u32 [#allocation2], 4
      %s17 = int_to_ptr.vmem [resolvable:$true] %s16
      %19 = dma.hbm_to_vmem [thread:$0]  %s0, 16, %s17, [#allocation3]
    $region5: #{tpu_custom_call.1} parent=1 // pred_fallthru
      _
    // Predicated region
    $region6: #{tpu_custom_call.1} parent=1 // pred_check
      _
    $region7: #{tpu_custom_call.1} parent=1 // pred_check_branch
      %21 = sbr.rel (0) target = $region9
    $region8: #{tpu_custom_call.1} parent=1 // pred_region
      %s23 = ssub.s32 128, 128
      %24 = vsyncadd [#allocation6], %s23
      %s26 = sshll.u32 [#allocation5], 4
      %s27 = int_to_ptr.vmem [resolvable:$true] %s26
      %29 = dma.hbm_to_vmem [thread:$0]  %s1, 128, %s27, [#allocation6]
    $region9: #{tpu_custom_call.1} parent=1 // pred_fallthru
      _
    // Predicated region
    $region10: #{tpu_custom_call.1} parent=1 // pred_check
      _
    $region11: #{tpu_custom_call.1} parent=1 // pred_check_branch
      %31 = sbr.rel (0) target = $region13
    $region12: #{tpu_custom_call.1} parent=1 // pred_region
      %32 = dma.done [#allocation3], 16
    $region13: #{tpu_custom_call.1} parent=1 // pred_fallthru
      _
    // Predicated region
    $region14: #{tpu_custom_call.1} parent=1 // pred_check
      _
    $region15: #{tpu_custom_call.1} parent=1 // pred_check_branch
      %34 = sbr.rel (0) target = $region17
    $region16: #{tpu_custom_call.1} parent=1 // pred_region
      %35 = dma.done [#allocation6], 128
    $region17: #{tpu_custom_call.1} parent=1 // pred_fallthru
      _
    %v36 = vlaneseq
    %v37 = vshrl.u32 %v36, 7
    %v38 = vadd.s32 %v37, 8
    %v39 = vadd.s32 %v37, 16
    %v40 = vadd.s32 %v37, 24
    %v41 = vadd.s32 %v37, 32
    %v42 = vadd.s32 %v37, 40
    %v43 = vadd.s32 %v37, 48
    %v44 = vadd.s32 %v37, 56
    %v45 = vadd.s32 %v37, 64
    %v46 = vadd.s32 %v37, 72
    %v47 = vadd.s32 %v37, 80
    %v48 = vadd.s32 %v37, 88
    %v49 = vadd.s32 %v37, 96
    %v50 = vadd.s32 %v37, 104
    %v51 = vadd.s32 %v37, 112
    %v52 = vadd.s32 %v37, 120
    %v53 = vld [vmem:[#allocation2] sm:$0x1]
    %v54 = vlaneseq
    %v55 = vshrl.u32 %v54, 7
    %v56 = vsub.s32 0, %v55
    %v57 = vrot.slane %v53, %v56
    %vm58 = vcmp.eq.s32.totalorder %v37, %v57
    %vm59 = vcmp.eq.s32.totalorder %v38, %v57
    %vm60 = vcmp.eq.s32.totalorder %v39, %v57
    %vm61 = vcmp.eq.s32.totalorder %v40, %v57
    %vm62 = vcmp.eq.s32.totalorder %v41, %v57
    %vm63 = vcmp.eq.s32.totalorder %v42, %v57
    %vm64 = vcmp.eq.s32.totalorder %v43, %v57
    %vm65 = vcmp.eq.s32.totalorder %v44, %v57
    %vm66 = vcmp.eq.s32.totalorder %v45, %v57
    %vm67 = vcmp.eq.s32.totalorder %v46, %v57
    %vm68 = vcmp.eq.s32.totalorder %v47, %v57
    %vm69 = vcmp.eq.s32.totalorder %v48, %v57
    %vm70 = vcmp.eq.s32.totalorder %v49, %v57
    %vm71 = vcmp.eq.s32.totalorder %v50, %v57
    %vm72 = vcmp.eq.s32.totalorder %v51, %v57
    %vm73 = vcmp.eq.s32.totalorder %v52, %v57
    %v74 = vsel %vm58, 1, 0
    %v75 = vsel %vm59, 1, 0
    %v76 = vsel %vm60, 1, 0
    %v77 = vsel %vm61, 1, 0
    %v78 = vsel %vm62, 1, 0
    %v79 = vsel %vm63, 1, 0
    %v80 = vsel %vm64, 1, 0
    %v81 = vsel %vm65, 1, 0
    %v82 = vsel %vm66, 1, 0
    %v83 = vsel %vm67, 1, 0
    %v84 = vsel %vm68, 1, 0
    %v85 = vsel %vm69, 1, 0
    %v86 = vsel %vm70, 1, 0
    %v87 = vsel %vm71, 1, 0
    %v88 = vsel %vm72, 1, 0
    %v89 = vsel %vm73, 1, 0
    %v90 = vcvt.s32.f32 %v74
    %v91 = vcvt.s32.f32 %v75
    %v92 = vcvt.s32.f32 %v76
    %v93 = vcvt.s32.f32 %v77
    %v94 = vcvt.s32.f32 %v78
    %v95 = vcvt.s32.f32 %v79
    %v96 = vcvt.s32.f32 %v80
    %v97 = vcvt.s32.f32 %v81
    %v98 = vcvt.s32.f32 %v82
    %v99 = vcvt.s32.f32 %v83
    %v100 = vcvt.s32.f32 %v84
    %v101 = vcvt.s32.f32 %v85
    %v102 = vcvt.s32.f32 %v86
    %v103 = vcvt.s32.f32 %v87
    %v104 = vcvt.s32.f32 %v88
    %v105 = vcvt.s32.f32 %v89
    %v106 = vld [vmem:[#allocation5] sm:$0xff]
    %107 = vmatprep.subr.mxu0 0.0
    %108 = vmatpush1.msra.mxu0 %v90
    %109 = vmatprep.subr.mxu0 0.0
    %110 = vmatpush1.msra.mxu0 %v91
    %111 = vmatprep.subr.mxu0 0.0
    %112 = vmatpush1.msra.mxu0 %v92
    %113 = vmatprep.subr.mxu0 0.0
    %114 = vmatpush1.msra.mxu0 %v93
    %115 = vmatprep.subr.mxu0 0.0
    %116 = vmatpush1.msra.mxu0 %v94
    %117 = vmatprep.subr.mxu0 0.0
    %118 = vmatpush1.msra.mxu0 %v95
    %119 = vmatprep.subr.mxu0 0.0
    %120 = vmatpush1.msra.mxu0 %v96
    %121 = vmatprep.subr.mxu0 0.0
    %122 = vmatpush1.msra.mxu0 %v97
    %123 = vmatprep.subr.mxu0 0.0
    %124 = vmatpush1.msra.mxu0 %v98
    %125 = vmatprep.subr.mxu0 0.0
    %126 = vmatpush1.msra.mxu0 %v99
    %127 = vmatprep.subr.mxu0 0.0
    %128 = vmatpush1.msra.mxu0 %v100
    %129 = vmatprep.subr.mxu0 0.0
    %130 = vmatpush1.msra.mxu0 %v101
    %131 = vmatprep.subr.mxu0 0.0
    %132 = vmatpush1.msra.mxu0 %v102
    %133 = vmatprep.subr.mxu0 0.0
    %134 = vmatpush1.msra.mxu0 %v103
    %135 = vmatprep.subr.mxu0 0.0
    %136 = vmatpush1.msra.mxu0 %v104
    %137 = vmatprep.subr.mxu0 0.0
    %138 = vmatpush1.msra.mxu0 %v105
    %139 = vmatprep.subr.mxu0 0.0
    %140 = vmatpush1.msra.mxu0 0.0
    %141 = vmatprep.subr.mxu0 0.0
    %142 = vmatpush1.msra.mxu0 0.0
    %143 = vmatprep.subr.mxu0 0.0
    %144 = vmatpush1.msra.mxu0 0.0
    %145 = vmatprep.subr.mxu0 0.0
    %146 = vmatpush1.msra.mxu0 0.0
    %147 = vmatprep.subr.mxu0 0.0
    %148 = vmatpush1.msra.mxu0 0.0
    %149 = vmatprep.subr.mxu0 0.0
    %150 = vmatpush1.msra.mxu0 0.0
    %151 = vmatprep.subr.mxu0 0.0
    %152 = vmatpush1.msra.mxu0 0.0
    %153 = vmatprep.subr.mxu0 0.0
    %154 = vmatpush1.msra.mxu0 0.0
    %155 = vmatprep.subr.mxu0 0.0
    %156 = vmatpush1.msra.mxu0 0.0
    %157 = vmatprep.subr.mxu0 0.0
    %158 = vmatpush1.msra.mxu0 0.0
    %159 = vmatprep.subr.mxu0 0.0
    %160 = vmatpush1.msra.mxu0 0.0
    %161 = vmatprep.subr.mxu0 0.0
    %162 = vmatpush1.msra.mxu0 0.0
    %163 = vmatprep.subr.mxu0 0.0
    %164 = vmatpush1.msra.mxu0 0.0
    %165 = vmatprep.subr.mxu0 0.0
    %166 = vmatpush1.msra.mxu0 0.0
    %167 = vmatprep.subr.mxu0 0.0
    %168 = vmatpush1.msra.mxu0 0.0
    %169 = vmatprep.subr.mxu0 0.0
    %170 = vmatpush1.msra.mxu0 0.0
    %171 = vmatprep.mubr.f32.mxu0 0.0
    %172 = vmatmul.mubr.f32.gmra.mrb[0].mxu0 %v106
    %v173 = vpop.f32.mrb[0].mxu0
    %v174 = vadd.f32 0.0, %v173
    %v175 = vpop.f32.mrb[0].mxu0
    %176 = vdwg.mxu0
    %v177 = vsub.f32 0.0, %v174
    %v178 = vmul.f32 %v177, 1.442695
    %v179 = vpow.pop %v178
    %v180 = vadd.f32 %v179, 1.0
    %v181 = vrcp.pop %v180
    %182 = vst [vmem:[#allocation7] sm:$0x1] %v181
    // Predicated region
    $region18: #{tpu_custom_call.1} parent=1 // pred_check
      _
    $region19: #{tpu_custom_call.1} parent=1 // pred_check_branch
      %184 = sbr.rel (0) target = $region21
    $region20: #{tpu_custom_call.1} parent=1 // pred_region
      %s186 = ssub.s32 16, 16
      %187 = vsyncadd [#allocation4], %s186
      %s189 = sshll.u32 [#allocation7], 4
      %s190 = int_to_ptr.vmem [resolvable:$true] %s189
      %192 = dma.vmem_to_hbm [thread:$0]  %s190, 16, %s2, [#allocation4]
    $region21: #{tpu_custom_call.1} parent=1 // pred_fallthru
      _
    // Predicated region
    $region22: #{tpu_custom_call.1} parent=1 // pred_check
      _
    $region23: #{tpu_custom_call.1} parent=1 // pred_check_branch
      %194 = sbr.rel (0) target = $region25
    $region24: #{tpu_custom_call.1} parent=1 // pred_region
      %195 = dma.done [#allocation4], 16
    $region25: #{tpu_custom_call.1} parent=1 // pred_fallthru
      _
    %196 = vsyncpa [#allocation3], 1
    %197 = vsyncpa [#allocation6], 1
    %198 = vsyncpa [#allocation4], 1

</llo_original>
